<compile_context>
chip_gen: v7x
topology: tpu7x:2x2x1
jax: 0.10.0
libtpu: 0.0.40
codegen_flags: <defaults>
</compile_context>

<pallas_src>
import functools

import jax
import jax.numpy as jnp
from jax.experimental import pallas as pl
from jax.experimental.pallas import tpu as pltpu


def cbam_kernel(x_ref, w1_ref, w2_ref, coeff_ref, o_ref, *, H, W, NB):
    # x_ref    : (NB, C, HW) VMEM, input dtype (lane-dense: HW on lanes)
    # w1_ref   : (Ch, C)     VMEM f32  (fc1.weight, 1x1 conv C -> Ch)
    # w2_ref   : (C, Ch)     VMEM f32  (fc2.weight, 1x1 conv Ch -> C)
    # coeff_ref: (9, 2, HW)  VMEM f32  (3x3 conv taps x {avg,max}, boundary
    #                                   masks of the pad=1 zero padding folded in)
    # o_ref    : (NB, C, HW) VMEM, input dtype
    HW = H * W
    x = x_ref[...]                                                   # (NB, C, HW)

    # ---------------- Channel attention ----------------
    # Per-channel mean/max are lane reductions; accumulate the mean in f32 even
    # for bf16 inputs (precision), max is exact in the native dtype.
    avg_c = jnp.mean(x, axis=2, keepdims=True, dtype=jnp.float32)    # (NB, C, 1)
    max_c = jnp.max(x, axis=2, keepdims=True).astype(jnp.float32)    # (NB, C, 1)

    w1 = w1_ref[...]                                                 # (Ch, C)
    w2 = w2_ref[...]                                                 # (C, Ch)

    # Tiny shared MLP; avg & max paths fused into one (C, 2) operand per image.
    # NB <= 8 so this unrolled loop stays cheap; these dots are latency-only.
    ca_list = []
    for n in range(NB):
        pooled = jnp.concatenate([avg_c[n], max_c[n]], axis=1)               # (C, 2)
        h = jnp.dot(w1, pooled, preferred_element_type=jnp.float32)          # (Ch, 2)
        h = jnp.maximum(h, 0.0)
        o2 = jnp.dot(w2, h, preferred_element_type=jnp.float32)              # (C, 2)
        ca_list.append(jax.nn.sigmoid(o2[:, 0:1] + o2[:, 1:2]))              # (C, 1)
    ca = jnp.stack(ca_list, axis=0)                                          # (NB, C, 1)

    x_ca = x * ca.astype(x.dtype)                                    # (NB, C, HW)

    # ---------------- Spatial attention ----------------
    avg_m = jnp.mean(x_ca, axis=1, keepdims=True, dtype=jnp.float32)         # (NB, 1, HW)
    max_m = jnp.max(x_ca, axis=1, keepdims=True).astype(jnp.float32)         # (NB, 1, HW)
    maps = jnp.concatenate([avg_m, max_m], axis=1)                           # (NB, 2, HW)

    # 3x3 "same" conv done entirely in registers: per tap one XLU roll
    # (+-1 for W-neighbours, +-W for H-neighbours in the flattened layout)
    # and one multiply-accumulate against the pre-masked weight map.
    conv = jnp.zeros((NB, 2, HW), jnp.float32)
    for dy in (-1, 0, 1):
        for dx in (-1, 0, 1):
            s = dy * W + dx                                          # flat-index offset
            k = (dy + 1) * 3 + (dx + 1)
            rolled = maps if s == 0 else pltpu.roll(maps, shift=(-s) % HW, axis=2)
            conv = conv + rolled * coeff_ref[k]                      # (2, HW) broadcast
    sa = jax.nn.sigmoid(jnp.sum(conv, axis=1, keepdims=True))        # (NB, 1, HW)

    o_ref[...] = (x_ca * sa.astype(x_ca.dtype)).astype(o_ref.dtype)


def _choose_nb(N, C, HW, itemsize):
    """Pick batch-elements-per-grid-step under an explicit VMEM budget."""
    # Per image: double-buffered input + output blocks plus ~3 block-sized f32
    # temporaries the compiler keeps live (x_ca, conv/staging).
    per_img = 4 * C * HW * itemsize + 3 * C * HW * 4
    budget = 24 * 1024 * 1024            # v7x-safe working set (64 MiB physical VMEM)
    nb = max(1, min(N, budget // max(per_img, 1)))
    nb = min(nb, 8)                      # keep the unrolled channel-MLP small
    if N >= 2:
        nb = min(nb, N // 2)             # >= 2 grid steps -> both TensorCores on v7x
    nb = max(nb, 1)
    while N % nb:                        # NB must evenly divide N
        nb -= 1
    return nb


def cbam_pallas(x_nchw, fc1_w, fc2_w, sa_w):
    """x_nchw: (N, C, H, W). fc1_w: (Ch, C), fc2_w: (C, Ch), sa_w: (1, 2, 3, 3)."""
    N, C, H, W = x_nchw.shape
    Ch = fc1_w.shape[0]
    HW = H * W
    itemsize = jnp.dtype(x_nchw.dtype).itemsize

    NB = _choose_nb(N, C, HW, itemsize)

    # Free reshape (no data movement): keep native NCHW layout, flatten spatial.
    x_flat = x_nchw.reshape(N, C, HW)

    # Fold the pad=1 zero-padding boundary masks of the 3x3 conv into the
    # weights: coeff[k, c, p] = sa_w[0, c, ky, kx] * (tap k is in-bounds at p).
    pos = jnp.arange(HW, dtype=jnp.int32)
    row = pos // W
    col = pos % W
    saw = sa_w.reshape(2, 3, 3).astype(jnp.float32)
    coeff_rows = []
    for dy in (-1, 0, 1):
        for dx in (-1, 0, 1):
            ok = jnp.ones((HW,), dtype=bool)
            if dy == -1:
                ok = ok & (row >= 1)
            elif dy == 1:
                ok = ok & (row <= H - 2)
            if dx == -1:
                ok = ok & (col >= 1)
            elif dx == 1:
                ok = ok & (col <= W - 2)
            coeff_rows.append(
                saw[:, dy + 1, dx + 1][:, None] * ok.astype(jnp.float32)[None, :])
    coeff = jnp.stack(coeff_rows, axis=0)                            # (9, 2, HW) f32

    kernel = functools.partial(cbam_kernel, H=H, W=W, NB=NB)

    # Above v5e's 16 MiB scoped default, well under v7x's 64 MiB physical VMEM.
    vmem_limit = 40 * 1024 * 1024

    cost = pl.CostEstimate(
        flops=int(N * (6 * C * HW + 4 * C * Ch + 40 * HW)),
        transcendentals=int(N * (C + HW)),
        bytes_accessed=int(2 * N * C * HW * itemsize),
    )

    out_flat = pl.pallas_call(
        kernel,
        out_shape=jax.ShapeDtypeStruct((N, C, HW), x_nchw.dtype),
        grid=(N // NB,),
        in_specs=[
            pl.BlockSpec((NB, C, HW), lambda i: (i, 0, 0)),
            pl.BlockSpec((Ch, C), lambda i: (0, 0)),
            pl.BlockSpec((C, Ch), lambda i: (0, 0)),
            pl.BlockSpec((9, 2, HW), lambda i: (0, 0, 0)),
        ],
        out_specs=pl.BlockSpec((NB, C, HW), lambda i: (i, 0, 0)),
        compiler_params=pltpu.CompilerParams(
            dimension_semantics=("parallel",),
            vmem_limit_bytes=vmem_limit,
        ),
        cost_estimate=cost,
    )(x_flat, fc1_w.astype(jnp.float32), fc2_w.astype(jnp.float32), coeff)

    return out_flat.reshape(N, C, H, W)


def cbam_reference(x, fc1_w, fc2_w, sa_w):
    """Pure-JAX reference matching the PyTorch CBAM forward (NCHW)."""
    avg = jnp.mean(x, axis=(2, 3))                       # (N, C)
    mx = jnp.max(x, axis=(2, 3))                         # (N, C)

    def mlp(v):
        return jnp.maximum(v @ fc1_w.T, 0.0) @ fc2_w.T

    ca = jax.nn.sigmoid(mlp(avg) + mlp(mx))[:, :, None, None]
    x1 = x * ca

    avg_m = jnp.mean(x1, axis=1, keepdims=True)
    max_m = jnp.max(x1, axis=1, keepdims=True)
    s_in = jnp.concatenate([avg_m, max_m], axis=1)       # (N, 2, H, W)
    conv = jax.lax.conv_general_dilated(
        s_in, sa_w, window_strides=(1, 1), padding=((1, 1), (1, 1)),
        dimension_numbers=("NCHW", "OIHW", "NCHW"))
    sa = jax.nn.sigmoid(conv)
    return x1 * sa


if __name__ == "__main__":
    N, C, H, W = 2, 16, 16, 16
    ratio = 8
    Ch = C // ratio

    key = jax.random.PRNGKey(0)
    kx, k1, k2, k3 = jax.random.split(key, 4)

    x = jax.random.normal(kx, (N, C, H, W), dtype=jnp.float32)
    # deterministic parameter init (conv weights, no bias — as in the module)
    fc1_w = 0.3 * jax.random.normal(k1, (Ch, C), dtype=jnp.float32)       # fc1: Conv2d(C, Ch, 1)
    fc2_w = 0.3 * jax.random.normal(k2, (C, Ch), dtype=jnp.float32)       # fc2: Conv2d(Ch, C, 1)
    sa_w = 0.3 * jax.random.normal(k3, (1, 2, 3, 3), dtype=jnp.float32)   # SpatialAttention conv1

    out = cbam_pallas(x, fc1_w, fc2_w, sa_w)
    out = jax.block_until_ready(out)

    ref = cbam_reference(x, fc1_w, fc2_w, sa_w)
    assert out.shape == (N, C, H, W)
    err = float(jnp.max(jnp.abs(out - ref)))
    assert jnp.allclose(out, ref, atol=1e-4, rtol=1e-4), err

    print("KERNEL_OK")
</pallas_src>

<mosaic_0001>
module attributes {stable_mosaic.version = 11 : i64} {
  func.func @cbam_kernel(%arg0: i32, %arg1: memref<1x16x256xf32, #tpu.memory_space<vmem>>, %arg2: memref<2x16xf32, #tpu.memory_space<vmem>>, %arg3: memref<16x2xf32, #tpu.memory_space<vmem>>, %arg4: memref<9x2x256xf32, #tpu.memory_space<vmem>>, %arg5: memref<1x16x256xf32, #tpu.memory_space<vmem>>) attributes {dimension_semantics = [#tpu.dimension_semantics<parallel>], iteration_bounds = array<i64: 2>, scalar_prefetch = 0 : i64, scratch_operands = 0 : i64, tpu.core_type = #tpu.core_type<tc>, window_params = [{transform_indices = @transform_0, window_bounds = array<i64: 1, 16, 256>}, {pipeline_mode = #tpu.pipeline_mode<synchronous>, transform_indices = @transform_1, window_bounds = array<i64: 2, 16>}, {pipeline_mode = #tpu.pipeline_mode<synchronous>, transform_indices = @transform_2, window_bounds = array<i64: 16, 2>}, {pipeline_mode = #tpu.pipeline_mode<synchronous>, transform_indices = @transform_3, window_bounds = array<i64: 9, 2, 256>}, {transform_indices = @transform_4, window_bounds = array<i64: 1, 16, 256>}]} {
    %c0 = arith.constant 0 : index
    %c0_0 = arith.constant 0 : index
    %c0_1 = arith.constant 0 : index
    %0 = vector.load %arg1[%c0, %c0_0, %c0_1] : memref<1x16x256xf32, #tpu.memory_space<vmem>>, vector<1x16x256xf32>
    %cst = arith.constant dense<0.000000e+00> : vector<1x16xf32>
    %1 = vector.multi_reduction <add>, %0, %cst [2] : vector<1x16x256xf32> to vector<1x16xf32>
    %2 = vector.shape_cast %1 : vector<1x16xf32> to vector<1x16x1xf32>
    %cst_2 = arith.constant 2.560000e+02 : f32
    %3 = vector.broadcast %cst_2 : f32 to vector<1x16x1xf32>
    %4 = arith.divf %2, %3 : vector<1x16x1xf32>
    %cst_3 = arith.constant dense<0xFF800000> : vector<1x16xf32>
    %5 = vector.multi_reduction <maximumf>, %0, %cst_3 [2] : vector<1x16x256xf32> to vector<1x16xf32>
    %6 = vector.shape_cast %5 : vector<1x16xf32> to vector<1x16x1xf32>
    %c0_4 = arith.constant 0 : index
    %c0_5 = arith.constant 0 : index
    %7 = vector.load %arg2[%c0_4, %c0_5] : memref<2x16xf32, #tpu.memory_space<vmem>>, vector<2x16xf32>
    %c0_6 = arith.constant 0 : index
    %c0_7 = arith.constant 0 : index
    %8 = vector.load %arg3[%c0_6, %c0_7] : memref<16x2xf32, #tpu.memory_space<vmem>>, vector<16x2xf32>
    %9 = vector.shape_cast %4 : vector<1x16x1xf32> to vector<16x1xf32>
    %10 = vector.shape_cast %6 : vector<1x16x1xf32> to vector<16x1xf32>
    %11 = tpu.concatenate %9, %10 in 1 : vector<16x1xf32>, vector<16x1xf32> -> vector<16x2xf32>
    %cst_8 = arith.constant dense<0.000000e+00> : vector<2x2xf32>
    %12 = tpu.matmul %7, %11, %cst_8 {dimension_numbers = #tpu.dot_dimension_numbers<[1], [0], [0], [1], [0, 0, 1, 1], [], []>} : vector<2x16xf32>, vector<16x2xf32>, vector<2x2xf32> -> vector<2x2xf32>
    %cst_9 = arith.constant 0.000000e+00 : f32
    %13 = vector.broadcast %cst_9 : f32 to vector<2x2xf32>
    %14 = arith.maximumf %12, %13 : vector<2x2xf32>
    %cst_10 = arith.constant dense<0.000000e+00> : vector<16x2xf32>
    %15 = tpu.matmul %8, %14, %cst_10 {dimension_numbers = #tpu.dot_dimension_numbers<[1], [0], [0], [1], [0, 0, 1, 1], [], []>} : vector<16x2xf32>, vector<2x2xf32>, vector<16x2xf32> -> vector<16x2xf32>
    %16 = vector.extract_strided_slice %15 {offsets = [0, 0], sizes = [16, 1], strides = [1, 1]} : vector<16x2xf32> to vector<16x1xf32>
    %17 = vector.extract_strided_slice %15 {offsets = [0, 1], sizes = [16, 1], strides = [1, 1]} : vector<16x2xf32> to vector<16x1xf32>
    %18 = arith.addf %16, %17 : vector<16x1xf32>
    %19 = arith.negf %18 : vector<16x1xf32>
    %20 = math.exp %19 : vector<16x1xf32>
    %cst_11 = arith.constant 1.000000e+00 : f32
    %21 = vector.broadcast %cst_11 : f32 to vector<16x1xf32>
    %22 = arith.addf %21, %20 : vector<16x1xf32>
    %23 = arith.divf %21, %22 : vector<16x1xf32>
    %24 = vector.shape_cast %23 : vector<16x1xf32> to vector<1x16x1xf32>
    %25 = vector.broadcast %24 : vector<1x16x1xf32> to vector<1x16x256xf32>
    %26 = arith.mulf %0, %25 : vector<1x16x256xf32>
    %cst_12 = arith.constant dense<0.000000e+00> : vector<1x256xf32>
    %27 = vector.multi_reduction <add>, %26, %cst_12 [1] : vector<1x16x256xf32> to vector<1x256xf32>
    %28 = vector.shape_cast %27 : vector<1x256xf32> to vector<1x1x256xf32>
    %cst_13 = arith.constant 1.600000e+01 : f32
    %29 = vector.broadcast %cst_13 : f32 to vector<1x1x256xf32>
    %30 = arith.divf %28, %29 : vector<1x1x256xf32>
    %cst_14 = arith.constant dense<0xFF800000> : vector<1x256xf32>
    %31 = vector.multi_reduction <maximumf>, %26, %cst_14 [1] : vector<1x16x256xf32> to vector<1x256xf32>
    %32 = vector.shape_cast %31 : vector<1x256xf32> to vector<1x1x256xf32>
    %33 = tpu.concatenate %30, %32 in 1 : vector<1x1x256xf32>, vector<1x1x256xf32> -> vector<1x2x256xf32>
    %cst_15 = arith.constant 0.000000e+00 : f32
    %34 = vector.broadcast %cst_15 : f32 to vector<1x2x256xf32>
    %c17_i32 = arith.constant 17 : i32
    %35 = tpu.dynamic_rotate %33 by %c17_i32 dim 2 : vector<1x2x256xf32>, i32 -> vector<1x2x256xf32>
    %c0_16 = arith.constant 0 : index
    %c0_17 = arith.constant 0 : index
    %c0_18 = arith.constant 0 : index
    %36 = vector.load %arg4[%c0_16, %c0_17, %c0_18] : memref<9x2x256xf32, #tpu.memory_space<vmem>>, vector<1x2x256xf32>
    %37 = vector.shape_cast %36 : vector<1x2x256xf32> to vector<2x256xf32>
    %38 = vector.shape_cast %37 : vector<2x256xf32> to vector<1x2x256xf32>
    %39 = arith.mulf %35, %38 : vector<1x2x256xf32>
    %40 = arith.addf %34, %39 : vector<1x2x256xf32>
    %c16_i32 = arith.constant 16 : i32
    %41 = tpu.dynamic_rotate %33 by %c16_i32 dim 2 : vector<1x2x256xf32>, i32 -> vector<1x2x256xf32>
    %c1 = arith.constant 1 : index
    %c0_19 = arith.constant 0 : index
    %c0_20 = arith.constant 0 : index
    %42 = vector.load %arg4[%c1, %c0_19, %c0_20] : memref<9x2x256xf32, #tpu.memory_space<vmem>>, vector<1x2x256xf32>
    %43 = vector.shape_cast %42 : vector<1x2x256xf32> to vector<2x256xf32>
    %44 = vector.shape_cast %43 : vector<2x256xf32> to vector<1x2x256xf32>
    %45 = arith.mulf %41, %44 : vector<1x2x256xf32>
    %46 = arith.addf %40, %45 : vector<1x2x256xf32>
    %c15_i32 = arith.constant 15 : i32
    %47 = tpu.dynamic_rotate %33 by %c15_i32 dim 2 : vector<1x2x256xf32>, i32 -> vector<1x2x256xf32>
    %c2 = arith.constant 2 : index
    %c0_21 = arith.constant 0 : index
    %c0_22 = arith.constant 0 : index
    %48 = vector.load %arg4[%c2, %c0_21, %c0_22] : memref<9x2x256xf32, #tpu.memory_space<vmem>>, vector<1x2x256xf32>
    %49 = vector.shape_cast %48 : vector<1x2x256xf32> to vector<2x256xf32>
    %50 = vector.shape_cast %49 : vector<2x256xf32> to vector<1x2x256xf32>
    %51 = arith.mulf %47, %50 : vector<1x2x256xf32>
    %52 = arith.addf %46, %51 : vector<1x2x256xf32>
    %c1_i32 = arith.constant 1 : i32
    %53 = tpu.dynamic_rotate %33 by %c1_i32 dim 2 : vector<1x2x256xf32>, i32 -> vector<1x2x256xf32>
    %c3 = arith.constant 3 : index
    %c0_23 = arith.constant 0 : index
    %c0_24 = arith.constant 0 : index
    %54 = vector.load %arg4[%c3, %c0_23, %c0_24] : memref<9x2x256xf32, #tpu.memory_space<vmem>>, vector<1x2x256xf32>
    %55 = vector.shape_cast %54 : vector<1x2x256xf32> to vector<2x256xf32>
    %56 = vector.shape_cast %55 : vector<2x256xf32> to vector<1x2x256xf32>
    %57 = arith.mulf %53, %56 : vector<1x2x256xf32>
    %58 = arith.addf %52, %57 : vector<1x2x256xf32>
    %c4 = arith.constant 4 : index
    %c0_25 = arith.constant 0 : index
    %c0_26 = arith.constant 0 : index
    %59 = vector.load %arg4[%c4, %c0_25, %c0_26] : memref<9x2x256xf32, #tpu.memory_space<vmem>>, vector<1x2x256xf32>
    %60 = vector.shape_cast %59 : vector<1x2x256xf32> to vector<2x256xf32>
    %61 = vector.shape_cast %60 : vector<2x256xf32> to vector<1x2x256xf32>
    %62 = arith.mulf %33, %61 : vector<1x2x256xf32>
    %63 = arith.addf %58, %62 : vector<1x2x256xf32>
    %c255_i32 = arith.constant 255 : i32
    %64 = tpu.dynamic_rotate %33 by %c255_i32 dim 2 : vector<1x2x256xf32>, i32 -> vector<1x2x256xf32>
    %c5 = arith.constant 5 : index
    %c0_27 = arith.constant 0 : index
    %c0_28 = arith.constant 0 : index
    %65 = vector.load %arg4[%c5, %c0_27, %c0_28] : memref<9x2x256xf32, #tpu.memory_space<vmem>>, vector<1x2x256xf32>
    %66 = vector.shape_cast %65 : vector<1x2x256xf32> to vector<2x256xf32>
    %67 = vector.shape_cast %66 : vector<2x256xf32> to vector<1x2x256xf32>
    %68 = arith.mulf %64, %67 : vector<1x2x256xf32>
    %69 = arith.addf %63, %68 : vector<1x2x256xf32>
    %c241_i32 = arith.constant 241 : i32
    %70 = tpu.dynamic_rotate %33 by %c241_i32 dim 2 : vector<1x2x256xf32>, i32 -> vector<1x2x256xf32>
    %c6 = arith.constant 6 : index
    %c0_29 = arith.constant 0 : index
    %c0_30 = arith.constant 0 : index
    %71 = vector.load %arg4[%c6, %c0_29, %c0_30] : memref<9x2x256xf32, #tpu.memory_space<vmem>>, vector<1x2x256xf32>
    %72 = vector.shape_cast %71 : vector<1x2x256xf32> to vector<2x256xf32>
    %73 = vector.shape_cast %72 : vector<2x256xf32> to vector<1x2x256xf32>
    %74 = arith.mulf %70, %73 : vector<1x2x256xf32>
    %75 = arith.addf %69, %74 : vector<1x2x256xf32>
    %c240_i32 = arith.constant 240 : i32
    %76 = tpu.dynamic_rotate %33 by %c240_i32 dim 2 : vector<1x2x256xf32>, i32 -> vector<1x2x256xf32>
    %c7 = arith.constant 7 : index
    %c0_31 = arith.constant 0 : index
    %c0_32 = arith.constant 0 : index
    %77 = vector.load %arg4[%c7, %c0_31, %c0_32] : memref<9x2x256xf32, #tpu.memory_space<vmem>>, vector<1x2x256xf32>
    %78 = vector.shape_cast %77 : vector<1x2x256xf32> to vector<2x256xf32>
    %79 = vector.shape_cast %78 : vector<2x256xf32> to vector<1x2x256xf32>
    %80 = arith.mulf %76, %79 : vector<1x2x256xf32>
    %81 = arith.addf %75, %80 : vector<1x2x256xf32>
    %c239_i32 = arith.constant 239 : i32
    %82 = tpu.dynamic_rotate %33 by %c239_i32 dim 2 : vector<1x2x256xf32>, i32 -> vector<1x2x256xf32>
    %c8 = arith.constant 8 : index
    %c0_33 = arith.constant 0 : index
    %c0_34 = arith.constant 0 : index
    %83 = vector.load %arg4[%c8, %c0_33, %c0_34] : memref<9x2x256xf32, #tpu.memory_space<vmem>>, vector<1x2x256xf32>
    %84 = vector.shape_cast %83 : vector<1x2x256xf32> to vector<2x256xf32>
    %85 = vector.shape_cast %84 : vector<2x256xf32> to vector<1x2x256xf32>
    %86 = arith.mulf %82, %85 : vector<1x2x256xf32>
    %87 = arith.addf %81, %86 : vector<1x2x256xf32>
    %cst_35 = arith.constant dense<0.000000e+00> : vector<1x256xf32>
    %88 = vector.multi_reduction <add>, %87, %cst_35 [1] : vector<1x2x256xf32> to vector<1x256xf32>
    %89 = vector.shape_cast %88 : vector<1x256xf32> to vector<1x1x256xf32>
    %90 = arith.negf %89 : vector<1x1x256xf32>
    %91 = math.exp %90 : vector<1x1x256xf32>
    %cst_36 = arith.constant 1.000000e+00 : f32
    %92 = vector.broadcast %cst_36 : f32 to vector<1x1x256xf32>
    %93 = arith.addf %92, %91 : vector<1x1x256xf32>
    %94 = arith.divf %92, %93 : vector<1x1x256xf32>
    %95 = vector.broadcast %94 : vector<1x1x256xf32> to vector<1x16x256xf32>
    %96 = arith.mulf %26, %95 : vector<1x16x256xf32>
    %c0_37 = arith.constant 0 : index
    %c0_38 = arith.constant 0 : index
    %c0_39 = arith.constant 0 : index
    %97 = vector.load %arg5[%c0_37, %c0_38, %c0_39] : memref<1x16x256xf32, #tpu.memory_space<vmem>>, vector<1x16x256xf32>
    tpu.vector_store %arg5[%c0_37, %c0_38, %c0_39], %96 {strides = array<i32>} : memref<1x16x256xf32, #tpu.memory_space<vmem>>, vector<1x16x256xf32>,
    return
  }
  func.func @transform_0(%arg0: i32) -> (i32, i32, i32) {
    %c0_i32 = arith.constant 0 : i32
    %c0_i32_0 = arith.constant 0 : i32
    %c0_i32_1 = arith.constant 0 : i32
    return %arg0, %c0_i32, %c0_i32_0 : i32, i32, i32
  }
  func.func @transform_1(%arg0: i32) -> (i32, i32) {
    %c0_i32 = arith.constant 0 : i32
    %c0_i32_0 = arith.constant 0 : i32
    %c0_i32_1 = arith.constant 0 : i32
    return %c0_i32, %c0_i32_0 : i32, i32
  }
  func.func @transform_2(%arg0: i32) -> (i32, i32) {
    %c0_i32 = arith.constant 0 : i32
    %c0_i32_0 = arith.constant 0 : i32
    %c0_i32_1 = arith.constant 0 : i32
    return %c0_i32, %c0_i32_0 : i32, i32
  }
  func.func @transform_3(%arg0: i32) -> (i32, i32, i32) {
    %c0_i32 = arith.constant 0 : i32
    %c0_i32_0 = arith.constant 0 : i32
    %c0_i32_1 = arith.constant 0 : i32
    %c0_i32_2 = arith.constant 0 : i32
    return %c0_i32, %c0_i32_0, %c0_i32_1 : i32, i32, i32
  }
  func.func @transform_4(%arg0: i32) -> (i32, i32, i32) {
    %c0_i32 = arith.constant 0 : i32
    %c0_i32_0 = arith.constant 0 : i32
    %c0_i32_1 = arith.constant 0 : i32
    return %arg0, %c0_i32, %c0_i32_0 : i32, i32, i32
  }
}

</mosaic_0001>

<llo_original>
// kernel: tpu_custom_call.1
$region0: #{tpu_custom_call.1}
  #allocation0 [shape = 'u32[]', space=smem, size = 0x4, offset = 0x4, fixed_abs, tag = 'smem constant byte address 0x4 - core index']
  #allocation1 [shape = 'u32[144,128]{1,0:T(1,128)}', space=vmem, size = 0x12000, scoped, tag = 'internal scratch']
  %s0 = inlined_call_operand.hbm [shape: f32[2,16,256], index: 0, kind: input, shape index: {}]
  %s1 = inlined_call_operand.vmem [shape: f32[2,16], index: 1, kind: input, shape index: {}]
  %s2 = inlined_call_operand.vmem [shape: f32[16,2], index: 2, kind: input, shape index: {}]
  %s3 = inlined_call_operand.hbm [shape: f32[9,2,256], index: 3, kind: input, shape index: {}]
  %s4 = inlined_call_operand.hbm [shape: f32[2,16,256], index: 4, kind: output, shape index: {}]
  %s5 = sld [smem:[#allocation0]]
  $region57: #{tpu_custom_call.1} parent=0
    _
  %s7 = ssub.s32 1, %s5
  %s8 = scalar_select 0, %s7, %s5
  $region1: #{tpu_custom_call.1} parent=0
    #allocation2 [shape = 'u8[32768]{0}', space=vmem, size = 0x8000, scoped, tag = 'input window, operand 0']
    #allocation3 [shape = 's32[2]{0}', space=sflag, size = 0x8, scoped, tag = 'scoped memory for tpu_custom_call.1']
    #allocation4 [shape = 's32[2]{0}', space=sflag, size = 0x8, scoped, tag = 'scoped memory for tpu_custom_call.1']
    #allocation5 [shape = 'u8[18432]{0}', space=vmem, size = 0x4800, scoped, tag = 'input window, operand 3, single buffered']
    #allocation6 [shape = 's32[1]{0}', space=sflag, size = 0x4, scoped, tag = 'scoped memory for tpu_custom_call.1']
    #allocation7 [shape = 'u8[32768]{0}', space=vmem, size = 0x8000, scoped, tag = 'output window, operand 0']
    %9 = vsyncpa [#allocation3], 0
    %s10 = scalar_lea.sflag [#allocation3], 1
    %11 = vsyncpa %s10, 0
    %12 = vsyncpa [#allocation6], 0
    %13 = vsyncpa [#allocation4], 0
    %s14 = scalar_lea.sflag [#allocation4], 1
    %15 = vsyncpa %s14, 0
    loop: start=0, step=1, limit=4
    $region2: #{tpu_custom_call.1} parent=1 // loop_pre_header
      _
    $region3: #{tpu_custom_call.1} parent=1 // loop_header
      %s17 = sphi 0, %s21
      %p18 = scmp.ge.s32.totalorder %s17, 4
      %s27 = sphi 0, %s29
      %s30 = sphi 0, %s27
      %s31 = sphi 0, %s30
      %s47 = sphi 0, %s31
      %s51 = sphi 0, %s51
      %s53 = sphi 0, %s51
      %s54 = sphi 0, %s53
      %s68 = sphi 0, %s54
      %s72 = sphi 0, %s72
      %s74 = sphi 0, %s72
      %s75 = sphi 0, %s74
      %s89 = sphi 0, %s75
      %s93 = sphi 0, %s93
      %s95 = sphi 0, %s93
      %s96 = sphi 0, %s95
      %s110 = sphi 0, %s96
      %s116 = sphi 0, %s118
      %s119 = sphi 0, %s116
      %s120 = sphi 0, %s119
      %s136 = sphi 0, %s120
    $region4: #{tpu_custom_call.1} parent=1 // loop_header_branch
      %20 = sbr.rel (%p18) target = $region8
    $region5: #{tpu_custom_call.1} parent=1 // loop_body
      %s22 = ssub.s32 %s17, 1
      %s23 = ssub.s32 %s17, 2
      %s24 = sadd.s32 %s17, 1
      %s25 = ssub.s32 %s17, %s24
      %p26 = scmp.eq.s32.totalorder %s25, 0
      %s28 = sadd.s32 %s27, 1
      %s29 = scalar_select %p26, %s27, %s28
      %p32 = pneg %p26
      %p33 = scmp.eq.s32.totalorder %s17, 1
      %p34 = por %p32, %p33
      %p35 = scmp.ne.s32.totalorder %s27, %s30
      %p36 = scmp.eq.s32.totalorder %s17, 0
      %p37 = por %p35, %p36
      %p38 = scmp.ne.s32.totalorder %s27, %s30
      %p39 = scmp.eq.s32.totalorder %s22, 1
      %p40 = por %p38, %p39
      %p41 = scmp.ne.s32.totalorder %s30, %s31
      %p42 = scmp.eq.s32.totalorder %s22, 0
      %p43 = por %p41, %p42
      %p44 = scmp.ne.s32.totalorder %s30, %s31
      %p45 = scmp.eq.s32.totalorder %s23, 1
      %p46 = por %p44, %p45
      %p48 = scmp.ne.s32.totalorder %s31, %s47
      %p49 = scmp.eq.s32.totalorder %s23, 0
      %p50 = por %p48, %p49
      %s52 = sadd.s32 %s51, 1
      %p55 = scmp.eq.s32.totalorder %s17, 1
      %p56 = scmp.ne.s32.totalorder %s51, %s53
      %p57 = scmp.eq.s32.totalorder %s17, 0
      %p58 = por %p56, %p57
      %p59 = scmp.ne.s32.totalorder %s51, %s53
      %p60 = scmp.eq.s32.totalorder %s22, 1
      %p61 = por %p59, %p60
      %p62 = scmp.ne.s32.totalorder %s53, %s54
      %p63 = scmp.eq.s32.totalorder %s22, 0
      %p64 = por %p62, %p63
      %p65 = scmp.ne.s32.totalorder %s53, %s54
      %p66 = scmp.eq.s32.totalorder %s23, 1
      %p67 = por %p65, %p66
      %p69 = scmp.ne.s32.totalorder %s54, %s68
      %p70 = scmp.eq.s32.totalorder %s23, 0
      %p71 = por %p69, %p70
      %s73 = sadd.s32 %s72, 1
      %p76 = scmp.eq.s32.totalorder %s17, 1
      %p77 = scmp.ne.s32.totalorder %s72, %s74
      %p78 = scmp.eq.s32.totalorder %s17, 0
      %p79 = por %p77, %p78
      %p80 = scmp.ne.s32.totalorder %s72, %s74
      %p81 = scmp.eq.s32.totalorder %s22, 1
      %p82 = por %p80, %p81
      %p83 = scmp.ne.s32.totalorder %s74, %s75
      %p84 = scmp.eq.s32.totalorder %s22, 0
      %p85 = por %p83, %p84
      %p86 = scmp.ne.s32.totalorder %s74, %s75
      %p87 = scmp.eq.s32.totalorder %s23, 1
      %p88 = por %p86, %p87
      %p90 = scmp.ne.s32.totalorder %s75, %s89
      %p91 = scmp.eq.s32.totalorder %s23, 0
      %p92 = por %p90, %p91
      %s94 = sadd.s32 %s93, 1
      %p97 = scmp.eq.s32.totalorder %s17, 1
      %p98 = scmp.ne.s32.totalorder %s93, %s95
      %p99 = scmp.eq.s32.totalorder %s17, 0
      %p100 = por %p98, %p99
      %p101 = scmp.ne.s32.totalorder %s93, %s95
      %p102 = scmp.eq.s32.totalorder %s22, 1
      %p103 = por %p101, %p102
      %p104 = scmp.ne.s32.totalorder %s95, %s96
      %p105 = scmp.eq.s32.totalorder %s22, 0
      %p106 = por %p104, %p105
      %p107 = scmp.ne.s32.totalorder %s95, %s96
      %p108 = scmp.eq.s32.totalorder %s23, 1
      %p109 = por %p107, %p108
      %p111 = scmp.ne.s32.totalorder %s96, %s110
      %p112 = scmp.eq.s32.totalorder %s23, 0
      %p113 = por %p111, %p112
      %s114 = ssub.s32 %s17, %s24
      %p115 = scmp.eq.s32.totalorder %s114, 0
      %s117 = sadd.s32 %s116, 1
      %s118 = scalar_select %p115, %s116, %s117
      %p121 = pneg %p115
      %p122 = scmp.eq.s32.totalorder %s17, 1
      %p123 = por %p121, %p122
      %p124 = scmp.ne.s32.totalorder %s116, %s119
      %p125 = scmp.eq.s32.totalorder %s17, 0
      %p126 = por %p124, %p125
      %p127 = scmp.ne.s32.totalorder %s116, %s119
      %p128 = scmp.eq.s32.totalorder %s22, 1
      %p129 = por %p127, %p128
      %p130 = scmp.ne.s32.totalorder %s119, %s120
      %p131 = scmp.eq.s32.totalorder %s22, 0
      %p132 = por %p130, %p131
      %p133 = scmp.ne.s32.totalorder %s119, %s120
      %p134 = scmp.eq.s32.totalorder %s23, 1
      %p135 = por %p133, %p134
      %p137 = scmp.ne.s32.totalorder %s120, %s136
      %p138 = scmp.eq.s32.totalorder %s23, 0
      %p139 = por %p137, %p138
      %p140 = scmp.le.s32.totalorder 1, %s17
      %p141 = scmp.lt.s32.totalorder %s17, 3
      %p142 = pnand %p140, %p141
      %p143 = pneg %p142
      // Predicated region
      $region9: #{tpu_custom_call.1} parent=5 // pred_check
        _
      $region10: #{tpu_custom_call.1} parent=5 // pred_check_branch
        %145 = sbr.rel (%p142) target = $region12
      $region11: #{tpu_custom_call.1} parent=5 // pred_region
        %s146 = ssub.s32 %s17, 1
        // Predicated region
        $region13: #{tpu_custom_call.1} parent=11 // pred_check
          %p147 = pneg %p64
        $region14: #{tpu_custom_call.1} parent=11 // pred_check_branch
          %149 = sbr.rel (%p147) target = $region16
        $region15: #{tpu_custom_call.1} parent=11 // pred_region
          _
        $region16: #{tpu_custom_call.1} parent=11 // pred_fallthru
          _
        // Predicated region
        $region17: #{tpu_custom_call.1} parent=11 // pred_check
          %p150 = pneg %p85
        $region18: #{tpu_custom_call.1} parent=11 // pred_check_branch
          %152 = sbr.rel (%p150) target = $region20
        $region19: #{tpu_custom_call.1} parent=11 // pred_region
          _
        $region20: #{tpu_custom_call.1} parent=11 // pred_fallthru
          _
        // Predicated region
        $region21: #{tpu_custom_call.1} parent=11 // pred_check
          %p153 = pneg %p106
        $region22: #{tpu_custom_call.1} parent=11 // pred_check_branch
          %155 = sbr.rel (%p153) target = $region24
        $region23: #{tpu_custom_call.1} parent=11 // pred_region
          %s157 = ssub.s32 576, 576
          %158 = vsyncadd [#allocation6], %s157
          %s159 = sshll.u32 [#allocation5], 4
          %s160 = int_to_ptr.vmem [resolvable:$true] %s159
          %165 = dma.hbm_to_vmem [thread:$0]  %s3, 576, %s160, [#allocation6], 64, 64, 4
        $region24: #{tpu_custom_call.1} parent=11 // pred_fallthru
          _
      $region12: #{tpu_custom_call.1} parent=5 // pred_fallthru
        _
      %p166 = scmp.lt.s32.totalorder %s17, 2
      // Predicated region
      $region25: #{tpu_custom_call.1} parent=5 // pred_check
        %p167 = pneg %p166
      $region26: #{tpu_custom_call.1} parent=5 // pred_check_branch
        %169 = sbr.rel (%p167) target = $region28
      $region27: #{tpu_custom_call.1} parent=5 // pred_region
        // Predicated region
        $region29: #{tpu_custom_call.1} parent=27 // pred_check
          %p170 = pneg %p37
        $region30: #{tpu_custom_call.1} parent=27 // pred_check_branch
          %172 = sbr.rel (%p170) target = $region32
        $region31: #{tpu_custom_call.1} parent=27 // pred_region
          %s173 = sand.u32 %s27, 1
          %s174 = scalar_lea.sflag [#allocation3], %s173
          %s175 = sand.u32 %s27, 1
          %s176 = smul.addr %s175, 32
          %s177 = scalar_lea.vmem [#allocation2], %s176
          %s179 = ssub.s32 512, 512
          %180 = vsyncadd %s174, %s179
          %s181 = smul.addr %s17, 4
          %s182 = smul.addr %s181, 128
          %s183 = scalar_lea.hbm %s0, %s182
          %s184 = sshll.u32 %s177, 4
          %s185 = int_to_ptr.vmem [resolvable:$true] %s184
          %190 = dma.hbm_to_vmem [thread:$0]  %s183, 512, %s185, %s174, 256, 256, 16
        $region32: #{tpu_custom_call.1} parent=27 // pred_fallthru
          _
      $region28: #{tpu_custom_call.1} parent=5 // pred_fallthru
        _
      %p191 = scmp.le.s32.totalorder 1, %s17
      %p192 = scmp.lt.s32.totalorder %s17, 3
      %p193 = pnand %p191, %p192
      %p194 = pneg %p193
      // Predicated region
      $region33: #{tpu_custom_call.1} parent=5 // pred_check
        _
      $region34: #{tpu_custom_call.1} parent=5 // pred_check_branch
        %196 = sbr.rel (%p193) target = $region36
      $region35: #{tpu_custom_call.1} parent=5 // pred_region
        %s197 = ssub.s32 %s17, 1
        %s198 = sand.u32 %s30, 1
        %s199 = scalar_lea.sflag [#allocation3], %s198
        %s200 = sand.u32 %s30, 1
        %s201 = smul.addr %s200, 32
        %s202 = scalar_lea.vmem [#allocation2], %s201
        // Predicated region
        $region37: #{tpu_custom_call.1} parent=35 // pred_check
          %p203 = pneg %p43
        $region38: #{tpu_custom_call.1} parent=35 // pred_check_branch
          %205 = sbr.rel (%p203) target = $region40
        $region39: #{tpu_custom_call.1} parent=35 // pred_region
          %206 = dma.done %s199, 512
        $region40: #{tpu_custom_call.1} parent=35 // pred_fallthru
          _
        // Predicated region
        $region41: #{tpu_custom_call.1} parent=35 // pred_check
          %p207 = pneg %p106
        $region42: #{tpu_custom_call.1} parent=35 // pred_check_branch
          %209 = sbr.rel (%p207) target = $region44
        $region43: #{tpu_custom_call.1} parent=35 // pred_region
          %210 = dma.done [#allocation6], 576
        $region44: #{tpu_custom_call.1} parent=35 // pred_fallthru
          _
        %s211 = sand.u32 %s30, 1
        %s212 = scalar_lea.sflag [#allocation3], %s211
        %s213 = sand.u32 %s30, 1
        %s214 = smul.addr %s213, 32
        %s215 = scalar_lea.vmem [#allocation2], %s214
        %p216 = pneg %p43
        %p217 = pneg %p40
        %p218 = pneg %p64
        %p219 = pneg %p61
        %p220 = pneg %p85
        %p221 = pneg %p82
        %p222 = pneg %p106
        %p223 = pneg %p103
        %p224 = pneg %p132
        %p225 = pneg %p129
        %s226 = sand.u32 %s119, 1
        %s227 = scalar_lea.sflag [#allocation4], %s226
        %s228 = sand.u32 %s119, 1
        %s229 = smul.addr %s228, 32
        %s230 = scalar_lea.vmem [#allocation7], %s229
        %v231 = vld [vmem:[%s202] sm:$0xff]
        %v232 = vld [vmem:[%s202 + $0x8] sm:$0xff]
        %v233 = vld [vmem:[%s202 + $0x10] sm:$0xff]
        %v234 = vld [vmem:[%s202 + $0x18] sm:$0xff]
        %v235 = vadd.f32 %v231, %v232
        %236 = vadd.xlane.f32.xlu0 %v235
        %v237 = vpop.xlane.xlu0 %236
        %v238 = vadd.f32 %v233, %v234
        %239 = vadd.xlane.f32.xlu0 %v238
        %v240 = vpop.xlane.xlu0 %239
        %v241 = vrcp.pop 256.0
        %v242 = vmul.f32 %v237, %v241
        %v243 = vmul.f32 %v240, %v241
        %v244 = vmax.f32 %v231, %v232
        %245 = vmax.xlane.f32.xlu0 %v244
        %v246 = vpop.xlane.xlu0 %245
        %v247 = vmax.f32 %v233, %v234
        %248 = vmax.xlane.f32.xlu0 %v247
        %v249 = vpop.xlane.xlu0 %248
        %v250 = vld [vmem:[%s1] sm:$0x3]
        %v251 = vld [vmem:[%s2] sm:$0xff]
        %v252 = vld [vmem:[%s2 + $0x8] sm:$0xff]
        %vm253 = vcmask 7168
        %v254 = vsel %vm253, %v242, %v246
        %v255 = vsel %vm253, %v243, %v249
        %vm256 = vcmask 130048
        %v258 = vsel %vm256, %v250, 0
        %260 = vmatprep.subr.mxu0 0.0
        %261 = vmatpush1.msra.mxu0 %v254
        %262 = vmatprep.subr.mxu0 0.0
        %263 = vmatpush1.msra.mxu0 %v255
        %264 = vmatprep.subr.mxu0 0.0
        %265 = vmatpush1.msra.mxu0 0.0
        %266 = vmatprep.subr.mxu0 0.0
        %267 = vmatpush1.msra.mxu0 0.0
        %268 = vmatprep.subr.mxu0 0.0
        %269 = vmatpush1.msra.mxu0 0.0
        %270 = vmatprep.subr.mxu0 0.0
        %271 = vmatpush1.msra.mxu0 0.0
        %272 = vmatprep.subr.mxu0 0.0
        %273 = vmatpush1.msra.mxu0 0.0
        %274 = vmatprep.subr.mxu0 0.0
        %275 = vmatpush1.msra.mxu0 0.0
        %276 = vmatprep.subr.mxu0 0.0
        %277 = vmatpush1.msra.mxu0 0.0
        %278 = vmatprep.subr.mxu0 0.0
        %279 = vmatpush1.msra.mxu0 0.0
        %280 = vmatprep.subr.mxu0 0.0
        %281 = vmatpush1.msra.mxu0 0.0
        %282 = vmatprep.subr.mxu0 0.0
        %283 = vmatpush1.msra.mxu0 0.0
        %284 = vmatprep.subr.mxu0 0.0
        %285 = vmatpush1.msra.mxu0 0.0
        %286 = vmatprep.subr.mxu0 0.0
        %287 = vmatpush1.msra.mxu0 0.0
        %288 = vmatprep.subr.mxu0 0.0
        %289 = vmatpush1.msra.mxu0 0.0
        %290 = vmatprep.subr.mxu0 0.0
        %291 = vmatpush1.msra.mxu0 0.0
        %292 = vmatprep.subr.mxu0 0.0
        %293 = vmatpush1.msra.mxu0 0.0
        %294 = vmatprep.subr.mxu0 0.0
        %295 = vmatpush1.msra.mxu0 0.0
        %296 = vmatprep.subr.mxu0 0.0
        %297 = vmatpush1.msra.mxu0 0.0
        %298 = vmatprep.subr.mxu0 0.0
        %299 = vmatpush1.msra.mxu0 0.0
        %300 = vmatprep.subr.mxu0 0.0
        %301 = vmatpush1.msra.mxu0 0.0
        %302 = vmatprep.subr.mxu0 0.0
        %303 = vmatpush1.msra.mxu0 0.0
        %304 = vmatprep.subr.mxu0 0.0
        %305 = vmatpush1.msra.mxu0 0.0
        %306 = vmatprep.subr.mxu0 0.0
        %307 = vmatpush1.msra.mxu0 0.0
        %308 = vmatprep.subr.mxu0 0.0
        %309 = vmatpush1.msra.mxu0 0.0
        %310 = vmatprep.subr.mxu0 0.0
        %311 = vmatpush1.msra.mxu0 0.0
        %312 = vmatprep.subr.mxu0 0.0
        %313 = vmatpush1.msra.mxu0 0.0
        %314 = vmatprep.subr.mxu0 0.0
        %315 = vmatpush1.msra.mxu0 0.0
        %316 = vmatprep.subr.mxu0 0.0
        %317 = vmatpush1.msra.mxu0 0.0
        %318 = vmatprep.subr.mxu0 0.0
        %319 = vmatpush1.msra.mxu0 0.0
        %320 = vmatprep.subr.mxu0 0.0
        %321 = vmatpush1.msra.mxu0 0.0
        %322 = vmatprep.subr.mxu0 0.0
        %323 = vmatpush1.msra.mxu0 0.0
        %324 = vmatprep.mubr.f32.mxu0 0.0
        %325 = vmatmul.mubr.f32.gmra.mrb[0].mxu0 %v258
        %v326 = vpop.f32.mrb[0].mxu0
        %v327 = vadd.f32 0.0, %v326
        %v328 = vpop.f32.mrb[0].mxu0
        %329 = vdwg.mxu0
        %v330 = vmax.f32 %v327, 0.0
        %vm331 = vcmask 15360
        %v333 = vsel %vm331, %v251, 0
        %v336 = vsel %vm331, %v252, 0
        %vm338 = vcmask 1041408
        %v340 = vsel %vm338, %v330, 0
        %342 = vmatprep.subr.mxu0 0.0
        %343 = vmatpush1.msra.mxu0 %v340
        %344 = vmatprep.subr.mxu0 0.0
        %345 = vmatpush1.msra.mxu0 0.0
        %346 = vmatprep.subr.mxu0 0.0
        %347 = vmatpush1.msra.mxu0 0.0
        %348 = vmatprep.subr.mxu0 0.0
        %349 = vmatpush1.msra.mxu0 0.0
        %350 = vmatprep.subr.mxu0 0.0
        %351 = vmatpush1.msra.mxu0 0.0
        %352 = vmatprep.subr.mxu0 0.0
        %353 = vmatpush1.msra.mxu0 0.0
        %354 = vmatprep.subr.mxu0 0.0
        %355 = vmatpush1.msra.mxu0 0.0
        %356 = vmatprep.subr.mxu0 0.0
        %357 = vmatpush1.msra.mxu0 0.0
        %358 = vmatprep.subr.mxu0 0.0
        %359 = vmatpush1.msra.mxu0 0.0
        %360 = vmatprep.subr.mxu0 0.0
        %361 = vmatpush1.msra.mxu0 0.0
        %362 = vmatprep.subr.mxu0 0.0
        %363 = vmatpush1.msra.mxu0 0.0
        %364 = vmatprep.subr.mxu0 0.0
        %365 = vmatpush1.msra.mxu0 0.0
        %366 = vmatprep.subr.mxu0 0.0
        %367 = vmatpush1.msra.mxu0 0.0
        %368 = vmatprep.subr.mxu0 0.0
        %369 = vmatpush1.msra.mxu0 0.0
        %370 = vmatprep.subr.mxu0 0.0
        %371 = vmatpush1.msra.mxu0 0.0
        %372 = vmatprep.subr.mxu0 0.0
        %373 = vmatpush1.msra.mxu0 0.0
        %374 = vmatprep.subr.mxu0 0.0
        %375 = vmatpush1.msra.mxu0 0.0
        %376 = vmatprep.subr.mxu0 0.0
        %377 = vmatpush1.msra.mxu0 0.0
        %378 = vmatprep.subr.mxu0 0.0
        %379 = vmatpush1.msra.mxu0 0.0
        %380 = vmatprep.subr.mxu0 0.0
        %381 = vmatpush1.msra.mxu0 0.0
        %382 = vmatprep.subr.mxu0 0.0
        %383 = vmatpush1.msra.mxu0 0.0
        %384 = vmatprep.subr.mxu0 0.0
        %385 = vmatpush1.msra.mxu0 0.0
        %386 = vmatprep.subr.mxu0 0.0
        %387 = vmatpush1.msra.mxu0 0.0
        %388 = vmatprep.subr.mxu0 0.0
        %389 = vmatpush1.msra.mxu0 0.0
        %390 = vmatprep.subr.mxu0 0.0
        %391 = vmatpush1.msra.mxu0 0.0
        %392 = vmatprep.subr.mxu0 0.0
        %393 = vmatpush1.msra.mxu0 0.0
        %394 = vmatprep.subr.mxu0 0.0
        %395 = vmatpush1.msra.mxu0 0.0
        %396 = vmatprep.subr.mxu0 0.0
        %397 = vmatpush1.msra.mxu0 0.0
        %398 = vmatprep.subr.mxu0 0.0
        %399 = vmatpush1.msra.mxu0 0.0
        %400 = vmatprep.subr.mxu0 0.0
        %401 = vmatpush1.msra.mxu0 0.0
        %402 = vmatprep.subr.mxu0 0.0
        %403 = vmatpush1.msra.mxu0 0.0
        %404 = vmatprep.subr.mxu0 0.0
        %405 = vmatpush1.msra.mxu0 0.0
        %406 = vmatprep.mubr.f32.mxu0 0.0
        %407 = vmatmul.mubr.f32.gmra.mrb[0].mxu0 %v333
        %v408 = vpop.f32.mrb[0].mxu0
        %v409 = vadd.f32 0.0, %v408
        %v410 = vpop.f32.mrb[0].mxu0
        %411 = vmatprep.mubr.f32.mxu0 0.0
        %412 = vmatmul.mubr.f32.gmra.mrb[0].mxu0 %v336
        %v413 = vpop.f32.mrb[0].mxu0
        %v414 = vadd.f32 0.0, %v413
        %v415 = vpop.f32.mrb[0].mxu0
        %416 = vdwg.mxu0
        %419 = vrot.lane.b32.xlu0 %v409, 127
        %v420 = vpop.permute.xlu0 %419
        %421 = vrot.lane.b32.xlu0 %v414, 127
        %v422 = vpop.permute.xlu0 %421
        %v425 = vadd.f32 %v409, %v420
        %v426 = vadd.f32 %v414, %v422
        %v427 = vxor.u32 %v425, 2147483648
        %v428 = vxor.u32 %v426, 2147483648
        %v429 = vmul.f32 %v427, 1.442695
        %v430 = vpow.pop %v429
        %v431 = vmul.f32 %v428, 1.442695
        %v432 = vpow.pop %v431
        %v433 = vadd.f32 %v430, 1.0
        %v434 = vadd.f32 %v432, 1.0
        %v435 = vrcp.pop %v433
        %v436 = vmul.f32 1.0, %v435
        %v437 = vrcp.pop %v434
        %v438 = vmul.f32 1.0, %v437
        %440 = vset.pattern.permute.xlu0 0
        %441 = vperm.xlu0 %440, %v436
        %v442 = vpop.permute.xlu0 %441
        %445 = vset.pattern.permute.xlu0 0
        %446 = vperm.xlu0 %445, %v438
        %v447 = vpop.permute.xlu0 %446
        %v449 = vmul.f32 %v231, %v442
        %v450 = vmul.f32 %v232, %v442
        %v451 = vmul.f32 %v233, %v447
        %v452 = vmul.f32 %v234, %v447
        %v453 = vadd.f32 %v449, %v451
        %v454 = vrot.slane %v453, 4
        %v455 = vadd.f32 %v453, %v454
        %v456 = vrot.slane %v455, 2
        %v457 = vadd.f32 %v455, %v456
        %v458 = vrot.slane %v457, 1
        %v459 = vadd.f32 %v457, %v458
        %v460 = vadd.f32 %v450, %v452
        %v461 = vrot.slane %v460, 4
        %v462 = vadd.f32 %v460, %v461
        %v463 = vrot.slane %v462, 2
        %v464 = vadd.f32 %v462, %v463
        %v465 = vrot.slane %v464, 1
        %v466 = vadd.f32 %v464, %v465
        %v467 = vrcp.pop 16.0
        %v468 = vmul.f32 %v459, %v467
        %v469 = vmul.f32 %v466, %v467
        %v470 = vmax.f32 %v449, %v451
        %v471 = vrot.slane %v470, 4
        %v472 = vmax.f32 %v470, %v471
        %v473 = vrot.slane %v472, 2
        %v474 = vmax.f32 %v472, %v473
        %v475 = vrot.slane %v474, 1
        %v476 = vmax.f32 %v474, %v475
        %v477 = vmax.f32 %v450, %v452
        %v478 = vrot.slane %v477, 4
        %v479 = vmax.f32 %v477, %v478
        %v480 = vrot.slane %v479, 2
        %v481 = vmax.f32 %v479, %v480
        %v482 = vrot.slane %v481, 1
        %v483 = vmax.f32 %v481, %v482
        %vm484 = vcmask 1040384
        %v485 = vsel %vm484, %v468, %v476
        %v486 = vsel %vm484, %v469, %v483
        %487 = vrot.lane.b32.xlu0 %v485, 17
        %v488 = vpop.permute.xlu0 %487
        %489 = vrot.lane.b32.xlu0 %v486, 17
        %v490 = vpop.permute.xlu0 %489
        %v491 = vlaneseq
        %v492 = vand.u32 %v491, 127
        %vm493 = vcmp.lt.s32.totalorder %v492, 17
        %v494 = vsel %vm493, %v488, %v490
        %v495 = vsel %vm493, %v490, %v488
        %v496 = vld [vmem:[#allocation5] sm:$0xf]
        %v499 = vunpack.c.l.s4 1983009808
        %v500 = vunpack.c.0.s8 %v499
        %v501 = vlaneseq
        %v502 = vshrl.u32 %v501, 7
        %v503 = vsub.s32 %v500, %v502
        %v504 = vrot.slane %v496, %v503
        %v505 = vcombine.high %v504, %v504
        %v508 = vmul.f32 %v495, %v504
        %v509 = vmul.f32 %v494, %v505
        %v510 = vadd.f32 %v508, 0.0
        %v511 = vadd.f32 %v509, 0.0
        %512 = vrot.lane.b32.xlu0 %v485, 16
        %v513 = vpop.permute.xlu0 %512
        %514 = vrot.lane.b32.xlu0 %v486, 16
        %v515 = vpop.permute.xlu0 %514
        %vm516 = vcmp.lt.s32.totalorder %v492, 16
        %v517 = vsel %vm516, %v513, %v515
        %v518 = vsel %vm516, %v515, %v513
        %s519 = scalar_lea.vmem [#allocation5], 4
        %v520 = vld [vmem:[%s519] sm:$0xf]
        %v523 = vunpack.c.l.s4 1983009808
        %v524 = vunpack.c.0.s8 %v523
        %v525 = vlaneseq
        %v526 = vshrl.u32 %v525, 7
        %v527 = vsub.s32 %v524, %v526
        %v528 = vrot.slane %v520, %v527
        %v529 = vcombine.high %v528, %v528
        %v532 = vmul.f32 %v518, %v528
        %v533 = vmul.f32 %v517, %v529
        %v534 = vadd.f32 %v510, %v532
        %v535 = vadd.f32 %v511, %v533
        %536 = vrot.lane.b32.xlu0 %v485, 15
        %v537 = vpop.permute.xlu0 %536
        %538 = vrot.lane.b32.xlu0 %v486, 15
        %v539 = vpop.permute.xlu0 %538
        %vm540 = vcmp.lt.s32.totalorder %v492, 15
        %v541 = vsel %vm540, %v537, %v539
        %v542 = vsel %vm540, %v539, %v537
        %s543 = scalar_lea.vmem [#allocation5], 8
        %v544 = vld [vmem:[%s543] sm:$0xf]
        %v547 = vunpack.c.l.s4 1983009808
        %v548 = vunpack.c.0.s8 %v547
        %v549 = vlaneseq
        %v550 = vshrl.u32 %v549, 7
        %v551 = vsub.s32 %v548, %v550
        %v552 = vrot.slane %v544, %v551
        %v553 = vcombine.high %v552, %v552
        %v556 = vmul.f32 %v542, %v552
        %v557 = vmul.f32 %v541, %v553
        %v558 = vadd.f32 %v534, %v556
        %v559 = vadd.f32 %v535, %v557
        %560 = vrot.lane.b32.xlu0 %v485, 1
        %v561 = vpop.permute.xlu0 %560
        %562 = vrot.lane.b32.xlu0 %v486, 1
        %v563 = vpop.permute.xlu0 %562
        %vm564 = vcmp.lt.s32.totalorder %v492, 1
        %v565 = vsel %vm564, %v561, %v563
        %v566 = vsel %vm564, %v563, %v561
        %s567 = scalar_lea.vmem [#allocation5], 12
        %v568 = vld [vmem:[%s567] sm:$0xf]
        %v571 = vunpack.c.l.s4 1983009808
        %v572 = vunpack.c.0.s8 %v571
        %v573 = vlaneseq
        %v574 = vshrl.u32 %v573, 7
        %v575 = vsub.s32 %v572, %v574
        %v576 = vrot.slane %v568, %v575
        %v577 = vcombine.high %v576, %v576
        %v580 = vmul.f32 %v566, %v576
        %v581 = vmul.f32 %v565, %v577
        %v582 = vadd.f32 %v558, %v580
        %v583 = vadd.f32 %v559, %v581
        %s584 = scalar_lea.vmem [#allocation5], 16
        %v585 = vld [vmem:[%s584] sm:$0xf]
        %v588 = vunpack.c.l.s4 1983009808
        %v589 = vunpack.c.0.s8 %v588
        %v590 = vlaneseq
        %v591 = vshrl.u32 %v590, 7
        %v592 = vsub.s32 %v589, %v591
        %v593 = vrot.slane %v585, %v592
        %v594 = vcombine.high %v593, %v593
        %v597 = vmul.f32 %v485, %v593
        %v598 = vmul.f32 %v486, %v594
        %v599 = vadd.f32 %v582, %v597
        %v600 = vadd.f32 %v583, %v598
        %601 = vrot.lane.b32.xlu0 %v485, 127
        %v602 = vpop.permute.xlu0 %601
        %603 = vrot.lane.b32.xlu0 %v486, 127
        %v604 = vpop.permute.xlu0 %603
        %vm605 = vcmp.lt.s32.totalorder %v492, 127
        %v606 = vsel %vm605, %v602, %v604
        %v607 = vsel %vm605, %v604, %v602
        %s608 = scalar_lea.vmem [#allocation5], 20
        %v609 = vld [vmem:[%s608] sm:$0xf]
        %v612 = vunpack.c.l.s4 1983009808
        %v613 = vunpack.c.0.s8 %v612
        %v614 = vlaneseq
        %v615 = vshrl.u32 %v614, 7
        %v616 = vsub.s32 %v613, %v615
        %v617 = vrot.slane %v609, %v616
        %v618 = vcombine.high %v617, %v617
        %v621 = vmul.f32 %v606, %v617
        %v622 = vmul.f32 %v607, %v618
        %v623 = vadd.f32 %v599, %v621
        %v624 = vadd.f32 %v600, %v622
        %625 = vrot.lane.b32.xlu0 %v485, 113
        %v626 = vpop.permute.xlu0 %625
        %627 = vrot.lane.b32.xlu0 %v486, 113
        %v628 = vpop.permute.xlu0 %627
        %vm629 = vcmp.lt.s32.totalorder %v492, 113
        %v630 = vsel %vm629, %v626, %v628
        %v631 = vsel %vm629, %v628, %v626
        %s632 = scalar_lea.vmem [#allocation5], 24
        %v633 = vld [vmem:[%s632] sm:$0xf]
        %v636 = vunpack.c.l.s4 1983009808
        %v637 = vunpack.c.0.s8 %v636
        %v638 = vlaneseq
        %v639 = vshrl.u32 %v638, 7
        %v640 = vsub.s32 %v637, %v639
        %v641 = vrot.slane %v633, %v640
        %v642 = vcombine.high %v641, %v641
        %v645 = vmul.f32 %v630, %v641
        %v646 = vmul.f32 %v631, %v642
        %v647 = vadd.f32 %v623, %v645
        %v648 = vadd.f32 %v624, %v646
        %649 = vrot.lane.b32.xlu0 %v485, 112
        %v650 = vpop.permute.xlu0 %649
        %651 = vrot.lane.b32.xlu0 %v486, 112
        %v652 = vpop.permute.xlu0 %651
        %vm653 = vcmp.lt.s32.totalorder %v492, 112
        %v654 = vsel %vm653, %v650, %v652
        %v655 = vsel %vm653, %v652, %v650
        %s656 = scalar_lea.vmem [#allocation5], 28
        %v657 = vld [vmem:[%s656] sm:$0xf]
        %v660 = vunpack.c.l.s4 1983009808
        %v661 = vunpack.c.0.s8 %v660
        %v662 = vlaneseq
        %v663 = vshrl.u32 %v662, 7
        %v664 = vsub.s32 %v661, %v663
        %v665 = vrot.slane %v657, %v664
        %v666 = vcombine.high %v665, %v665
        %v669 = vmul.f32 %v654, %v665
        %v670 = vmul.f32 %v655, %v666
        %v671 = vadd.f32 %v647, %v669
        %v672 = vadd.f32 %v648, %v670
        %673 = vrot.lane.b32.xlu0 %v485, 111
        %v674 = vpop.permute.xlu0 %673
        %675 = vrot.lane.b32.xlu0 %v486, 111
        %v676 = vpop.permute.xlu0 %675
        %vm677 = vcmp.lt.s32.totalorder %v492, 111
        %v678 = vsel %vm677, %v674, %v676
        %v679 = vsel %vm677, %v676, %v674
        %s680 = scalar_lea.vmem [#allocation5], 32
        %v681 = vld [vmem:[%s680] sm:$0xf]
        %v684 = vunpack.c.l.s4 1983009808
        %v685 = vunpack.c.0.s8 %v684
        %v686 = vlaneseq
        %v687 = vshrl.u32 %v686, 7
        %v688 = vsub.s32 %v685, %v687
        %v689 = vrot.slane %v681, %v688
        %v690 = vcombine.high %v689, %v689
        %v693 = vmul.f32 %v678, %v689
        %v694 = vmul.f32 %v679, %v690
        %v695 = vadd.f32 %v671, %v693
        %v696 = vadd.f32 %v672, %v694
        %v697 = vsel %vm338, %v695, 0.0
        %v698 = vrot.slane %v697, 4
        %v699 = vadd.f32 %v697, %v698
        %v700 = vrot.slane %v699, 2
        %v701 = vadd.f32 %v699, %v700
        %v702 = vrot.slane %v701, 1
        %v703 = vadd.f32 %v701, %v702
        %v704 = vsel %vm338, %v696, 0.0
        %v705 = vrot.slane %v704, 4
        %v706 = vadd.f32 %v704, %v705
        %v707 = vrot.slane %v706, 2
        %v708 = vadd.f32 %v706, %v707
        %v709 = vrot.slane %v708, 1
        %v710 = vadd.f32 %v708, %v709
        %v711 = vxor.u32 %v703, 2147483648
        %v712 = vxor.u32 %v710, 2147483648
        %v713 = vmul.f32 %v711, 1.442695
        %v714 = vpow.pop %v713
        %v715 = vmul.f32 %v712, 1.442695
        %v716 = vpow.pop %v715
        %v717 = vadd.f32 %v714, 1.0
        %v718 = vadd.f32 %v716, 1.0
        %v719 = vrcp.pop %v717
        %v720 = vmul.f32 1.0, %v719
        %v721 = vrcp.pop %v718
        %v722 = vmul.f32 1.0, %v721
        %v723 = vmul.f32 %v449, %v720
        %v724 = vmul.f32 %v450, %v722
        %v725 = vmul.f32 %v451, %v720
        %v726 = vmul.f32 %v452, %v722
        %727 = vst [vmem:[%s230] sm:$0xff] %v723
        %728 = vst [vmem:[%s230 + $0x8] sm:$0xff] %v724
        %729 = vst [vmem:[%s230 + $0x10] sm:$0xff] %v725
        %730 = vst [vmem:[%s230 + $0x18] sm:$0xff] %v726
        %s731 = sand.u32 %s119, 1
        %s732 = scalar_lea.sflag [#allocation4], %s731
        %s733 = sand.u32 %s119, 1
        %s734 = smul.addr %s733, 32
        %s735 = scalar_lea.vmem [#allocation7], %s734
        // Predicated region
        $region45: #{tpu_custom_call.1} parent=35 // pred_check
          %p736 = pneg %p129
        $region46: #{tpu_custom_call.1} parent=35 // pred_check_branch
          %738 = sbr.rel (%p736) target = $region48
        $region47: #{tpu_custom_call.1} parent=35 // pred_region
          %s740 = ssub.s32 512, 512
          %741 = vsyncadd %s732, %s740
          %s742 = smul.addr %s22, 4
          %s743 = smul.addr %s742, 128
          %s744 = scalar_lea.hbm %s4, %s743
          %s745 = sshll.u32 %s735, 4
          %s746 = int_to_ptr.vmem [resolvable:$true] %s745
          %751 = dma.vmem_to_hbm [thread:$0]  %s746, 512, %s744, %s732, 256, 256, 16
        $region48: #{tpu_custom_call.1} parent=35 // pred_fallthru
          _
      $region36: #{tpu_custom_call.1} parent=5 // pred_fallthru
        _
      %p752 = scmp.le.s32.totalorder 2, %s17
      // Predicated region
      $region49: #{tpu_custom_call.1} parent=5 // pred_check
        %p753 = pneg %p752
      $region50: #{tpu_custom_call.1} parent=5 // pred_check_branch
        %755 = sbr.rel (%p753) target = $region52
      $region51: #{tpu_custom_call.1} parent=5 // pred_region
        %s756 = ssub.s32 %s17, 2
        // Predicated region
        $region53: #{tpu_custom_call.1} parent=51 // pred_check
          %p757 = pneg %p135
        $region54: #{tpu_custom_call.1} parent=51 // pred_check_branch
          %759 = sbr.rel (%p757) target = $region56
        $region55: #{tpu_custom_call.1} parent=51 // pred_region
          %s760 = sand.u32 %s120, 1
          %s761 = scalar_lea.sflag [#allocation4], %s760
          %s762 = sand.u32 %s120, 1
          %s763 = smul.addr %s762, 32
          %s764 = scalar_lea.vmem [#allocation7], %s763
          %765 = dma.done %s761, 512
        $region56: #{tpu_custom_call.1} parent=51 // pred_fallthru
          _
      $region52: #{tpu_custom_call.1} parent=5 // pred_fallthru
        _
    $region6: #{tpu_custom_call.1} parent=1 // loop_footer
      %s21 = sadd.s32 1, %s17
    $region7: #{tpu_custom_call.1} parent=1 // loop_footer_branch
      %16 = sbr.rel target = $region3
    $region8: #{tpu_custom_call.1} parent=1 // loop_exit
      _
    %766 = vsyncpa [#allocation3], 1
    %s767 = scalar_lea.sflag [#allocation3], 1
    %768 = vsyncpa %s767, 1
    %769 = vsyncpa [#allocation6], 1
    %770 = vsyncpa [#allocation4], 1
    %s771 = scalar_lea.sflag [#allocation4], 1
    %772 = vsyncpa %s771, 1

</llo_original>
